<compile_context>
chip_gen: v7x
topology: tpu7x:2x2x1
jax: 0.10.0
libtpu: 0.0.40
codegen_flags: <defaults>
</compile_context>

<pallas_src>
import functools
import math

import jax
import jax.numpy as jnp
from jax import lax
from jax.experimental import pallas as pl
from jax.experimental.pallas import tpu as pltpu

EPS = 1e-24  # matches self.eps in the PyTorch module

# splitmix32-style mixing constants, written as wrapped int32 literals.
_GOLD = -1640531527   # 0x9E3779B9
_M1 = -2048144789     # 0x85EBCA6B
_M2 = -1028477387     # 0xC2B2AE35
_ONE_F32_BITS = 0x3F800000  # exponent bits of 1.0f


def _shr(z, n):
    # logical right shift on int32 (arithmetic shift would smear the sign bit)
    return lax.shift_right_logical(z, jnp.int32(n))


def _mix32(z):
    z = (z ^ _shr(z, 16)) * _M1
    z = (z ^ _shr(z, 13)) * _M2
    return z ^ _shr(z, 16)


def _gumbel_softmax_kernel(seed_ref, inv_tau_ref, x_ref, o_ref, *, normed):
    # seed_ref: SMEM (1,) int32 ; inv_tau_ref: SMEM (1,) float32
    # x_ref / o_ref: VMEM (TILE_ROWS, V) blocks (native dtype)
    tr, v = x_ref.shape

    x = x_ref[...].astype(jnp.float32)
    if normed:
        x = jnp.log(x + EPS)

    # ---- counter-based PRNG: hash (seed, global_row, col) -> 32 random bits ----
    seed = seed_ref[0]
    row0 = pl.program_id(0) * tr
    rows = lax.broadcasted_iota(jnp.int32, (tr, v), 0) + row0
    cols = lax.broadcasted_iota(jnp.int32, (tr, v), 1)
    row_key = _mix32(rows + seed * _GOLD)
    bits = _mix32((cols * _M2) ^ row_key)

    # uniform in [0,1) via mantissa bit trick: [1,2) float minus 1.0
    mant = _shr(bits, 9)                      # 23 random mantissa bits
    u = lax.bitcast_convert_type(mant | _ONE_F32_BITS, jnp.float32) - 1.0
    u = jnp.maximum(u, 1e-12)                 # avoid log(0)
    g = -jnp.log(-jnp.log(u))                 # standard Gumbel noise

    # ---- gumbel-softmax (soft) over the last axis ----
    y = (x + g) * inv_tau_ref[0]              # multiply by 1/tau (no per-element divide)
    m = jnp.max(y, axis=-1, keepdims=True)
    e = jnp.exp(y - m)
    s = jnp.sum(e, axis=-1, keepdims=True)
    o_ref[...] = (e * (1.0 / s)).astype(o_ref.dtype)  # per-row reciprocal is cheap


def _pick_tile_rows(R, V):
    # Target ~1 MiB of f32 compute per block; respect the (8,128) sublane rule.
    target_bytes = 1 << 20
    tr = max(1, target_bytes // (4 * max(V, 1)))
    tr = min(tr, R)
    if R >= 8:
        tr = max(8, (tr // 8) * 8)
    return tr


def gumbel_softmax(x, tau, normed, seed=0, tile_rows=None):
    """x: [..., V] float array.  Returns softmax(((log(x+eps) if normed else x) + g) / tau, -1)."""
    orig_shape = x.shape
    V = orig_shape[-1]
    R = math.prod(orig_shape[:-1]) if len(orig_shape) > 1 else 1

    x2d = x.reshape(R, V)
    tr = tile_rows if tile_rows is not None else _pick_tile_rows(R, V)
    tr = min(tr, R)
    if R >= 8:
        tr = max(8, (tr // 8) * 8)
    grid = (pl.cdiv(R, tr),)

    seed_arr = jnp.asarray([seed], dtype=jnp.int32)
    inv_tau_arr = (1.0 / jnp.asarray(tau, dtype=jnp.float32)).reshape((1,))

    kernel = functools.partial(_gumbel_softmax_kernel, normed=normed)

    out2d = pl.pallas_call(
        kernel,
        out_shape=jax.ShapeDtypeStruct((R, V), x.dtype),  # preserve input dtype at HBM
        grid=grid,
        in_specs=[
            pl.BlockSpec(memory_space=pltpu.MemorySpace.SMEM),   # seed
            pl.BlockSpec(memory_space=pltpu.MemorySpace.SMEM),   # 1/tau
            pl.BlockSpec((tr, V), lambda i: (i, 0)),             # x tile
        ],
        out_specs=pl.BlockSpec((tr, V), lambda i: (i, 0)),
        compiler_params=pltpu.CompilerParams(
            dimension_semantics=("parallel",),      # row blocks are independent (v7x: 2 TCs)
            vmem_limit_bytes=48 * 1024 * 1024,      # headroom for large blocks on all gens
        ),
    )(seed_arr, inv_tau_arr, x2d)

    return out2d.reshape(orig_shape)


# TODO(synk): the rep_penalize=True branch (Counter-based repetition penalty with host-side
# python RNG and index_select) has no clean Pallas equivalent and is not implemented; only
# the default (soft) gumbel-softmax path is kernelized.


if __name__ == "__main__":
    key = jax.random.PRNGKey(0)
    B, S, V = 2, 8, 128  # small shapes; V lane-aligned to 128
    # Positive "probability-like" inputs so the normed=True log() path is well-defined.
    logits = jax.random.uniform(key, (B, S, V), dtype=jnp.float32, minval=0.0, maxval=1.0)
    probs = logits / jnp.sum(logits, axis=-1, keepdims=True)

    out = gumbel_softmax(probs, tau=0.5, normed=True, seed=1234)
    out = jax.block_until_ready(out)

    # Sanity: each row sums to 1 and values are in [0, 1]; dtype preserved.
    row_sums = jnp.sum(out.astype(jnp.float32), axis=-1)
    assert out.shape == (B, S, V)
    assert out.dtype == probs.dtype
    assert bool(jnp.all(jnp.abs(row_sums - 1.0) < 1e-3))
    assert bool(jnp.all(out >= 0.0)) and bool(jnp.all(out <= 1.0))

    print("KERNEL_OK")
</pallas_src>

<mosaic_0001>
module attributes {stable_mosaic.version = 11 : i64} {
  func.func @_gumbel_softmax_kernel(%arg0: i32, %arg1: memref<1xi32, #tpu.memory_space<smem>>, %arg2: memref<1xf32, #tpu.memory_space<smem>>, %arg3: memref<16x128xf32, #tpu.memory_space<vmem>>, %arg4: memref<16x128xf32, #tpu.memory_space<vmem>>) attributes {dimension_semantics = [#tpu.dimension_semantics<parallel>], iteration_bounds = array<i64: 1>, scalar_prefetch = 0 : i64, scratch_operands = 0 : i64, tpu.core_type = #tpu.core_type<tc>, window_params = [{transform_indices = @transform_0, window_bounds = array<i64: 1>}, {transform_indices = @transform_1, window_bounds = array<i64: 1>}, {transform_indices = @transform_2, window_bounds = array<i64: 16, 128>}, {transform_indices = @transform_3, window_bounds = array<i64: 16, 128>}]} {
    %c0 = arith.constant 0 : index
    %c0_0 = arith.constant 0 : index
    %0 = vector.load %arg3[%c0, %c0_0] : memref<16x128xf32, #tpu.memory_space<vmem>>, vector<16x128xf32>
    %cst = arith.constant 1.000000e-24 : f32
    %1 = vector.broadcast %cst : f32 to vector<16x128xf32>
    %2 = arith.addf %0, %1 : vector<16x128xf32>
    %3 = math.log %2 : vector<16x128xf32>
    %c0_1 = arith.constant 0 : index
    %4 = memref.load %arg1[%c0_1] : memref<1xi32, #tpu.memory_space<smem>>
    %c16_i32 = arith.constant 16 : i32
    %5 = arith.muli %arg0, %c16_i32 : i32
    %6 = tpu.iota {dimensions = array<i32: 0>} : vector<16x128xi32>
    %7 = vector.broadcast %5 : i32 to vector<16x128xi32>
    %8 = arith.addi %6, %7 : vector<16x128xi32>
    %9 = tpu.iota {dimensions = array<i32: 1>} : vector<16x128xi32>
    %c-1640531527_i32 = arith.constant -1640531527 : i32
    %10 = arith.muli %4, %c-1640531527_i32 : i32
    %11 = vector.broadcast %10 : i32 to vector<16x128xi32>
    %12 = arith.addi %8, %11 : vector<16x128xi32>
    %c16_i32_2 = arith.constant 16 : i32
    %13 = vector.broadcast %c16_i32_2 : i32 to vector<16x128xi32>
    %14 = arith.shrui %12, %13 : vector<16x128xi32>
    %15 = arith.xori %12, %14 : vector<16x128xi32>
    %c-2048144789_i32 = arith.constant -2048144789 : i32
    %16 = vector.broadcast %c-2048144789_i32 : i32 to vector<16x128xi32>
    %17 = arith.muli %15, %16 : vector<16x128xi32>
    %c13_i32 = arith.constant 13 : i32
    %18 = vector.broadcast %c13_i32 : i32 to vector<16x128xi32>
    %19 = arith.shrui %17, %18 : vector<16x128xi32>
    %20 = arith.xori %17, %19 : vector<16x128xi32>
    %c-1028477387_i32 = arith.constant -1028477387 : i32
    %21 = vector.broadcast %c-1028477387_i32 : i32 to vector<16x128xi32>
    %22 = arith.muli %20, %21 : vector<16x128xi32>
    %c16_i32_3 = arith.constant 16 : i32
    %23 = vector.broadcast %c16_i32_3 : i32 to vector<16x128xi32>
    %24 = arith.shrui %22, %23 : vector<16x128xi32>
    %25 = arith.xori %22, %24 : vector<16x128xi32>
    %c-1028477387_i32_4 = arith.constant -1028477387 : i32
    %26 = vector.broadcast %c-1028477387_i32_4 : i32 to vector<16x128xi32>
    %27 = arith.muli %9, %26 : vector<16x128xi32>
    %28 = arith.xori %27, %25 : vector<16x128xi32>
    %c16_i32_5 = arith.constant 16 : i32
    %29 = vector.broadcast %c16_i32_5 : i32 to vector<16x128xi32>
    %30 = arith.shrui %28, %29 : vector<16x128xi32>
    %31 = arith.xori %28, %30 : vector<16x128xi32>
    %c-2048144789_i32_6 = arith.constant -2048144789 : i32
    %32 = vector.broadcast %c-2048144789_i32_6 : i32 to vector<16x128xi32>
    %33 = arith.muli %31, %32 : vector<16x128xi32>
    %c13_i32_7 = arith.constant 13 : i32
    %34 = vector.broadcast %c13_i32_7 : i32 to vector<16x128xi32>
    %35 = arith.shrui %33, %34 : vector<16x128xi32>
    %36 = arith.xori %33, %35 : vector<16x128xi32>
    %c-1028477387_i32_8 = arith.constant -1028477387 : i32
    %37 = vector.broadcast %c-1028477387_i32_8 : i32 to vector<16x128xi32>
    %38 = arith.muli %36, %37 : vector<16x128xi32>
    %c16_i32_9 = arith.constant 16 : i32
    %39 = vector.broadcast %c16_i32_9 : i32 to vector<16x128xi32>
    %40 = arith.shrui %38, %39 : vector<16x128xi32>
    %41 = arith.xori %38, %40 : vector<16x128xi32>
    %c9_i32 = arith.constant 9 : i32
    %42 = vector.broadcast %c9_i32 : i32 to vector<16x128xi32>
    %43 = arith.shrui %41, %42 : vector<16x128xi32>
    %c1065353216_i32 = arith.constant 1065353216 : i32
    %44 = vector.broadcast %c1065353216_i32 : i32 to vector<16x128xi32>
    %45 = arith.ori %43, %44 : vector<16x128xi32>
    %46 = tpu.bitcast %45 : vector<16x128xi32> -> vector<16x128xf32>
    %cst_10 = arith.constant 1.000000e+00 : f32
    %47 = vector.broadcast %cst_10 : f32 to vector<16x128xf32>
    %48 = arith.subf %46, %47 : vector<16x128xf32>
    %cst_11 = arith.constant 9.99999996E-13 : f32
    %49 = vector.broadcast %cst_11 : f32 to vector<16x128xf32>
    %50 = arith.maximumf %48, %49 : vector<16x128xf32>
    %51 = math.log %50 : vector<16x128xf32>
    %cst_12 = arith.constant 0.000000e+00 : f32
    %52 = vector.broadcast %cst_12 : f32 to vector<16x128xf32>
    %53 = arith.subf %52, %51 : vector<16x128xf32>
    %54 = math.log %53 : vector<16x128xf32>
    %cst_13 = arith.constant 0.000000e+00 : f32
    %55 = vector.broadcast %cst_13 : f32 to vector<16x128xf32>
    %56 = arith.subf %55, %54 : vector<16x128xf32>
    %57 = arith.addf %3, %56 : vector<16x128xf32>
    %c0_14 = arith.constant 0 : index
    %58 = memref.load %arg2[%c0_14] : memref<1xf32, #tpu.memory_space<smem>>
    %59 = vector.broadcast %58 : f32 to vector<16x128xf32>
    %60 = arith.mulf %57, %59 : vector<16x128xf32>
    %cst_15 = arith.constant dense<0xFF800000> : vector<16xf32>
    %61 = vector.multi_reduction <maximumf>, %60, %cst_15 [1] : vector<16x128xf32> to vector<16xf32>
    %62 = vector.shape_cast %61 : vector<16xf32> to vector<16x1xf32>
    %63 = vector.broadcast %62 : vector<16x1xf32> to vector<16x128xf32>
    %64 = arith.subf %60, %63 : vector<16x128xf32>
    %65 = math.exp %64 : vector<16x128xf32>
    %cst_16 = arith.constant dense<0.000000e+00> : vector<16xf32>
    %66 = vector.multi_reduction <add>, %65, %cst_16 [1] : vector<16x128xf32> to vector<16xf32>
    %67 = vector.shape_cast %66 : vector<16xf32> to vector<16x1xf32>
    %cst_17 = arith.constant 1.000000e+00 : f32
    %68 = vector.broadcast %cst_17 : f32 to vector<16x1xf32>
    %69 = arith.divf %68, %67 : vector<16x1xf32>
    %70 = vector.broadcast %69 : vector<16x1xf32> to vector<16x128xf32>
    %71 = arith.mulf %65, %70 : vector<16x128xf32>
    %c0_18 = arith.constant 0 : index
    %c0_19 = arith.constant 0 : index
    %72 = vector.load %arg4[%c0_18, %c0_19] : memref<16x128xf32, #tpu.memory_space<vmem>>, vector<16x128xf32>
    tpu.vector_store %arg4[%c0_18, %c0_19], %71 {strides = array<i32>} : memref<16x128xf32, #tpu.memory_space<vmem>>, vector<16x128xf32>,
    return
  }
  func.func @transform_0(%arg0: i32) -> i32 {
    %c0_i32 = arith.constant 0 : i32
    %c0_i32_0 = arith.constant 0 : i32
    return %c0_i32 : i32
  }
  func.func @transform_1(%arg0: i32) -> i32 {
    %c0_i32 = arith.constant 0 : i32
    %c0_i32_0 = arith.constant 0 : i32
    return %c0_i32 : i32
  }
  func.func @transform_2(%arg0: i32) -> (i32, i32) {
    %c0_i32 = arith.constant 0 : i32
    %c0_i32_0 = arith.constant 0 : i32
    return %arg0, %c0_i32 : i32, i32
  }
  func.func @transform_3(%arg0: i32) -> (i32, i32) {
    %c0_i32 = arith.constant 0 : i32
    %c0_i32_0 = arith.constant 0 : i32
    return %arg0, %c0_i32 : i32, i32
  }
}

</mosaic_0001>

<llo_original>
// kernel: tpu_custom_call.1
$region0: #{tpu_custom_call.1}
  #allocation0 [shape = 'u32[]', space=smem, size = 0x4, offset = 0x4, fixed_abs, tag = 'smem constant byte address 0x4 - core index']
  #allocation1 [shape = 'u32[144,128]{1,0:T(1,128)}', space=vmem, size = 0x12000, scoped, tag = 'internal scratch']
  #allocation2 [shape = 's32[1]{0:T(128)S(6)}', space=smem, size = 0x200, scoped, tag = 'scoped memory for tpu_custom_call.1']
  #allocation3 [shape = 'f32[1]{0:T(128)S(6)}', space=smem, size = 0x200, scoped, tag = 'scoped memory for tpu_custom_call.1']
  %s0 = inlined_call_operand.<no memory space> [shape: s32[1], index: 0, kind: input, shape index: {}]
  %s1 = inlined_call_operand.<no memory space> [shape: f32[1], index: 1, kind: input, shape index: {}]
  %s2 = inlined_call_operand.hbm [shape: f32[16,128], index: 2, kind: input, shape index: {}]
  %s3 = inlined_call_operand.hbm [shape: f32[16,128], index: 3, kind: output, shape index: {}]
  %s4 = sld [smem:[#allocation0]]
  $region26: #{tpu_custom_call.1} parent=0
    _
  %s6 = ssub.s32 1, %s4
  %s7 = scalar_select 0, %s6, %s4
  %8 = sst [smem:[#allocation2]] %s0
  %9 = sst [smem:[#allocation3]] %s1
  $region1: #{tpu_custom_call.1} parent=0
    #allocation4 [shape = 'u8[8192]{0}', space=vmem, size = 0x2000, scoped, tag = 'input window, operand 2, single buffered']
    #allocation5 [shape = 's32[1]{0}', space=sflag, size = 0x4, scoped, tag = 'scoped memory for tpu_custom_call.1']
    #allocation6 [shape = 's32[1]{0}', space=sflag, size = 0x4, scoped, tag = 'scoped memory for tpu_custom_call.1']
    #allocation7 [shape = 'u8[8192]{0}', space=vmem, size = 0x2000, scoped, tag = 'output window, operand 0, single buffered']
    %10 = vsyncpa [#allocation5], 0
    %11 = vsyncpa [#allocation6], 0
    // Predicated region
    $region2: #{tpu_custom_call.1} parent=1 // pred_check
      _
    $region3: #{tpu_custom_call.1} parent=1 // pred_check_branch
      %13 = sbr.rel (0) target = $region5
    $region4: #{tpu_custom_call.1} parent=1 // pred_region
      _
    $region5: #{tpu_custom_call.1} parent=1 // pred_fallthru
      _
    // Predicated region
    $region6: #{tpu_custom_call.1} parent=1 // pred_check
      _
    $region7: #{tpu_custom_call.1} parent=1 // pred_check_branch
      %15 = sbr.rel (0) target = $region9
    $region8: #{tpu_custom_call.1} parent=1 // pred_region
      _
    $region9: #{tpu_custom_call.1} parent=1 // pred_fallthru
      _
    // Predicated region
    $region10: #{tpu_custom_call.1} parent=1 // pred_check
      _
    $region11: #{tpu_custom_call.1} parent=1 // pred_check_branch
      %17 = sbr.rel (0) target = $region13
    $region12: #{tpu_custom_call.1} parent=1 // pred_region
      %s19 = ssub.s32 256, 256
      %20 = vsyncadd [#allocation5], %s19
      %s21 = sshll.u32 [#allocation4], 4
      %s22 = int_to_ptr.vmem [resolvable:$true] %s21
      %27 = dma.hbm_to_vmem [thread:$0]  %s2, 256, %s22, [#allocation5], 128, 128, 8
    $region13: #{tpu_custom_call.1} parent=1 // pred_fallthru
      _
    // Predicated region
    $region14: #{tpu_custom_call.1} parent=1 // pred_check
      _
    $region15: #{tpu_custom_call.1} parent=1 // pred_check_branch
      %29 = sbr.rel (0) target = $region17
    $region16: #{tpu_custom_call.1} parent=1 // pred_region
      %30 = dma.done [#allocation5], 256
    $region17: #{tpu_custom_call.1} parent=1 // pred_fallthru
      _
    %v31 = vld [vmem:[#allocation4] sm:$0xff]
    %v32 = vld [vmem:[#allocation4 + $0x8] sm:$0xff]
    %v33 = vadd.f32 %v31, 1e-24
    %v34 = vadd.f32 %v32, 1e-24
    %v35 = vlog2.pop %v33
    %v36 = vmul.f32 %v35, 0.6931472
    %v37 = vlog2.pop %v34
    %v38 = vmul.f32 %v37, 0.6931472
    %s39 = sld [smem:[#allocation2]]
    %s40 = smul.u32 0, 16
    %v41 = vlaneseq
    %v42 = vshrl.u32 %v41, 7
    %v43 = vadd.s32 %v42, 8
    %v44 = vstv %s40
    %v45 = vadd.s32 %v42, %v44
    %v46 = vadd.s32 %v43, %v44
    %v47 = vlaneseq
    %v48 = vand.u32 %v47, 127
    %s49 = smul.u32 %s39, 2654435769
    %v50 = vstv %s49
    %v51 = vadd.s32 %v45, %v50
    %v52 = vadd.s32 %v46, %v50
    %v53 = vshrl.u32 %v51, 16
    %v54 = vshrl.u32 %v52, 16
    %v55 = vxor.u32 %v51, %v53
    %v56 = vxor.u32 %v52, %v54
    %v57 = vmul.u32 %v55, 2246822507
    %v58 = vmul.u32 %v56, 2246822507
    %v59 = vshrl.u32 %v57, 13
    %v60 = vshrl.u32 %v58, 13
    %v61 = vxor.u32 %v57, %v59
    %v62 = vxor.u32 %v58, %v60
    %v63 = vmul.u32 %v61, 3266489909
    %v64 = vmul.u32 %v62, 3266489909
    %v65 = vshrl.u32 %v63, 16
    %v66 = vshrl.u32 %v64, 16
    %v67 = vxor.u32 %v63, %v65
    %v68 = vxor.u32 %v64, %v66
    %v69 = vmul.u32 %v48, 3266489909
    %v70 = vxor.u32 %v69, %v67
    %v71 = vxor.u32 %v69, %v68
    %v72 = vshrl.u32 %v70, 16
    %v73 = vshrl.u32 %v71, 16
    %v74 = vxor.u32 %v70, %v72
    %v75 = vxor.u32 %v71, %v73
    %v76 = vmul.u32 %v74, 2246822507
    %v77 = vmul.u32 %v75, 2246822507
    %v78 = vshrl.u32 %v76, 13
    %v79 = vshrl.u32 %v77, 13
    %v80 = vxor.u32 %v76, %v78
    %v81 = vxor.u32 %v77, %v79
    %v82 = vmul.u32 %v80, 3266489909
    %v83 = vmul.u32 %v81, 3266489909
    %v84 = vshrl.u32 %v82, 16
    %v85 = vshrl.u32 %v83, 16
    %v86 = vxor.u32 %v82, %v84
    %v87 = vxor.u32 %v83, %v85
    %v88 = vshrl.u32 %v86, 9
    %v89 = vshrl.u32 %v87, 9
    %v90 = vor.u32 %v88, 1065353216
    %v91 = vor.u32 %v89, 1065353216
    %v94 = vsub.f32 %v90, 1.0
    %v95 = vsub.f32 %v91, 1.0
    %v96 = vmax.f32 %v94, 1e-12
    %v97 = vmax.f32 %v95, 1e-12
    %v98 = vlog2.pop %v96
    %v99 = vmul.f32 %v98, 0.6931472
    %v100 = vlog2.pop %v97
    %v101 = vmul.f32 %v100, 0.6931472
    %v102 = vsub.f32 0.0, %v99
    %v103 = vsub.f32 0.0, %v101
    %v104 = vlog2.pop %v102
    %v105 = vmul.f32 %v104, 0.6931472
    %v106 = vlog2.pop %v103
    %v107 = vmul.f32 %v106, 0.6931472
    %v108 = vsub.f32 0.0, %v105
    %v109 = vsub.f32 0.0, %v107
    %v110 = vadd.f32 %v36, %v108
    %v111 = vadd.f32 %v38, %v109
    %s112 = sld [smem:[#allocation3]]
    %v113 = vstv %s112
    %v114 = vmul.f32 %v110, %v113
    %v115 = vmul.f32 %v111, %v113
    %116 = vmax.xlane.f32.xlu0 %v114
    %v117 = vpop.xlane.xlu0 %116
    %118 = vmax.xlane.f32.xlu0 %v115
    %v119 = vpop.xlane.xlu0 %118
    %v120 = vsub.f32 %v114, %v117
    %v121 = vsub.f32 %v115, %v119
    %v122 = vmul.f32 %v120, 1.442695
    %v123 = vpow.pop %v122
    %v124 = vmul.f32 %v121, 1.442695
    %v125 = vpow.pop %v124
    %126 = vadd.xlane.f32.xlu0 %v123
    %v127 = vpop.xlane.xlu0 %126
    %128 = vadd.xlane.f32.xlu0 %v125
    %v129 = vpop.xlane.xlu0 %128
    %v130 = vrcp.pop %v127
    %v131 = vmul.f32 1.0, %v130
    %v132 = vrcp.pop %v129
    %v133 = vmul.f32 1.0, %v132
    %v134 = vmul.f32 %v123, %v131
    %v135 = vmul.f32 %v125, %v133
    %136 = vst [vmem:[#allocation7] sm:$0xff] %v134
    %137 = vst [vmem:[#allocation7 + $0x8] sm:$0xff] %v135
    // Predicated region
    $region18: #{tpu_custom_call.1} parent=1 // pred_check
      _
    $region19: #{tpu_custom_call.1} parent=1 // pred_check_branch
      %139 = sbr.rel (0) target = $region21
    $region20: #{tpu_custom_call.1} parent=1 // pred_region
      %s141 = ssub.s32 256, 256
      %142 = vsyncadd [#allocation6], %s141
      %s143 = sshll.u32 [#allocation7], 4
      %s144 = int_to_ptr.vmem [resolvable:$true] %s143
      %149 = dma.vmem_to_hbm [thread:$0]  %s144, 256, %s3, [#allocation6], 128, 128, 8
    $region21: #{tpu_custom_call.1} parent=1 // pred_fallthru
      _
    // Predicated region
    $region22: #{tpu_custom_call.1} parent=1 // pred_check
      _
    $region23: #{tpu_custom_call.1} parent=1 // pred_check_branch
      %151 = sbr.rel (0) target = $region25
    $region24: #{tpu_custom_call.1} parent=1 // pred_region
      %152 = dma.done [#allocation6], 256
    $region25: #{tpu_custom_call.1} parent=1 // pred_fallthru
      _
    %153 = vsyncpa [#allocation5], 1
    %154 = vsyncpa [#allocation6], 1

</llo_original>
